<compile_context>
chip_gen: v5e
topology: v5e:2x2
jax: 0.10.0
libtpu: 0.0.40
codegen_flags: <defaults>
</compile_context>

<pallas_src>
import functools

import jax
import jax.numpy as jnp
from jax import lax
from jax.experimental import pallas as pl
from jax.experimental.pallas import tpu as pltpu


def _round_up(n, m):
    return ((n + m - 1) // m) * m


def critic_kernel(state_ref, action_ref, w1s_ref, w1a_ref, b1_ref, w2_ref,
                  b2_ref, o_ref, *, chunk):
    # Per grid step:
    #   state_ref : (TB, Sd)   action_ref: (TB, Ad)
    #   w1s_ref   : (Sd, H)    w1a_ref   : (Ad, H)    b1_ref: (1, H)
    #   w2_ref    : (1, H)     b2_ref    : (1, 1) in SMEM
    #   o_ref     : (TB, 1)
    tb = state_ref.shape[0]
    n_chunks = tb // chunk

    # Hoist the small resident operands out of the row-chunk loop.
    w1s = w1s_ref[...]
    w1a = w1a_ref[...]
    b1 = b1_ref[...]
    w2 = w2_ref[...]
    b2 = b2_ref[0, 0]

    def body(c, carry):
        r = pl.multiple_of(c * chunk, chunk)
        s = state_ref[pl.ds(r, chunk), :].astype(jnp.float32)
        a = action_ref[pl.ds(r, chunk), :].astype(jnp.float32)

        # Layer 1:  cat([s, a]) @ W1  ==  s @ W1_s + a @ W1_a   (exact)
        h = jnp.dot(s, w1s, preferred_element_type=jnp.float32)
        h = h + jnp.dot(a, w1a, preferred_element_type=jnp.float32)
        h = jnp.maximum(h + b1, 0.0)                 # bias + ReLU on the VPU

        # Layer 2 (H -> 1): keep it off the MXU (N=1 wastes the array);
        # VPU elementwise multiply + lane reduction instead.
        q = jnp.sum(h * w2, axis=-1, keepdims=True) + b2
        o_ref[pl.ds(r, chunk), :] = q.astype(o_ref.dtype)
        return carry

    lax.fori_loop(0, n_chunks, body, 0)


def critic_forward(state, action, params, *, block_b=8192, row_chunk=512):
    """Pallas forward pass. params = (w1, b1, w2, b2) with
       w1: (state_dim+action_dim, 128), b1: (1, 128), w2: (128, 1), b2: (1, 1)."""
    w1, b1, w2, b2 = params

    B, Sd = state.shape
    Ba, Ad = action.shape
    assert B == Ba, "state/action batch mismatch"
    H = w1.shape[1]

    # Split W1 so the kernel never needs the concatenated [state, action].
    w1_s = w1[:Sd, :]
    w1_a = w1[Sd:, :]
    b1 = b1.reshape(1, H)
    w2_row = w2.reshape(1, H)       # (H, 1) -> broadcast row (1, H)
    b2 = b2.reshape(1, 1)

    # Batch tile: large (amortizes per-grid-step overhead) and a multiple of the
    # inner row-chunk so chunks are uniform.  Pallas masks the ragged tail.
    tb = min(block_b, _round_up(B, 8))
    chunk = _round_up(min(row_chunk, tb), 8)
    tb = _round_up(tb, chunk)
    grid = (pl.cdiv(B, tb),)

    # VMEM budget: double-buffered in/out blocks + one f32 h chunk + weights.
    in_elt = jnp.dtype(state.dtype).itemsize
    act_elt = jnp.dtype(action.dtype).itemsize
    per_step = tb * (Sd * in_elt + Ad * act_elt + 4)
    vmem_need = 2 * per_step + 2 * chunk * H * 4 + (Sd + Ad + 2) * H * 4
    vmem_limit = int(min(max(2 * vmem_need, 32 * 1024 * 1024),
                         48 * 1024 * 1024))

    kernel = functools.partial(critic_kernel, chunk=chunk)

    return pl.pallas_call(
        kernel,
        out_shape=jax.ShapeDtypeStruct((B, 1), jnp.float32),
        grid=grid,
        in_specs=[
            pl.BlockSpec((tb, Sd), lambda i: (i, 0)),            # state tile
            pl.BlockSpec((tb, Ad), lambda i: (i, 0)),            # action tile
            pl.BlockSpec((Sd, H), lambda i: (0, 0)),             # resident W1_s
            pl.BlockSpec((Ad, H), lambda i: (0, 0)),             # resident W1_a
            pl.BlockSpec((1, H), lambda i: (0, 0)),              # resident b1
            pl.BlockSpec((1, H), lambda i: (0, 0)),              # resident W2 row
            pl.BlockSpec(memory_space=pltpu.MemorySpace.SMEM),   # b2 scalar
        ],
        out_specs=pl.BlockSpec((tb, 1), lambda i: (i, 0)),
        compiler_params=pltpu.CompilerParams(
            dimension_semantics=("parallel",),
            vmem_limit_bytes=vmem_limit),
    )(state, action, w1_s, w1_a, b1, w2_row, b2)


def critic_reference(state, action, params):
    """Pure-JAX reference of the same math (PyTorch forward semantics)."""
    w1, b1, w2, b2 = params
    x = jnp.concatenate([state.astype(jnp.float32),
                         action.astype(jnp.float32)], axis=1)
    return jnp.maximum(x @ w1 + b1, 0.0) @ w2 + b2


def init_critic_params(key, state_dim, action_dim, hidden=128):
    """Deterministic init mimicking PyTorch nn.Linear defaults:
       U(-1/sqrt(fan_in), 1/sqrt(fan_in)) for weights and biases."""
    d_in = state_dim + action_dim
    k1, k2, k3, k4 = jax.random.split(key, 4)
    bound1 = 1.0 / jnp.sqrt(d_in)
    bound2 = 1.0 / jnp.sqrt(hidden)
    # Stored as (in_features, out_features) so the kernel computes x @ W + b.
    w1 = jax.random.uniform(k1, (d_in, hidden), jnp.float32, -bound1, bound1)
    b1 = jax.random.uniform(k2, (1, hidden), jnp.float32, -bound1, bound1)
    w2 = jax.random.uniform(k3, (hidden, 1), jnp.float32, -bound2, bound2)
    b2 = jax.random.uniform(k4, (1, 1), jnp.float32, -bound2, bound2)
    return (w1, b1, w2, b2)


if __name__ == "__main__":
    STATE_DIM, ACTION_DIM = 16, 8

    key = jax.random.PRNGKey(0)
    k_state, k_action, k_params, k_state2, k_action2 = jax.random.split(key, 5)
    params = init_critic_params(k_params, STATE_DIM, ACTION_DIM)

    # Small batch (single grid step).
    B = 8
    state = jax.random.normal(k_state, (B, STATE_DIM), jnp.float32)
    action = jax.random.normal(k_action, (B, ACTION_DIM), jnp.float32)
    q = jax.block_until_ready(critic_forward(state, action, params))
    ref = critic_reference(state, action, params)
    assert q.shape == (B, 1)
    assert jnp.allclose(q, ref, atol=1e-4), "mismatch vs reference (B=8)"

    # Larger, non-divisible batch: exercises multi-step grid + ragged tail block
    # and the inner row-chunk loop (no wrapper padding / output slicing).
    B2 = 300
    state2 = jax.random.normal(k_state2, (B2, STATE_DIM), jnp.float32)
    action2 = jax.random.normal(k_action2, (B2, ACTION_DIM), jnp.float32)
    q2 = jax.block_until_ready(
        critic_forward(state2, action2, params, block_b=128, row_chunk=64))
    ref2 = critic_reference(state2, action2, params)
    assert q2.shape == (B2, 1)
    assert jnp.allclose(q2, ref2, atol=1e-4), "mismatch vs reference (B=300)"

    print("KERNEL_OK")
</pallas_src>

<mosaic_0001>
module attributes {stable_mosaic.version = 11 : i64} {
  func.func @critic_kernel(%arg0: i32, %arg1: memref<8x16xf32, #tpu.memory_space<vmem>>, %arg2: memref<8x8xf32, #tpu.memory_space<vmem>>, %arg3: memref<16x128xf32, #tpu.memory_space<vmem>>, %arg4: memref<8x128xf32, #tpu.memory_space<vmem>>, %arg5: memref<1x128xf32, #tpu.memory_space<vmem>>, %arg6: memref<1x128xf32, #tpu.memory_space<vmem>>, %arg7: memref<1x1xf32, #tpu.memory_space<smem>>, %arg8: memref<8x1xf32, #tpu.memory_space<vmem>>) attributes {dimension_semantics = [#tpu.dimension_semantics<parallel>], iteration_bounds = array<i64: 1>, scalar_prefetch = 0 : i64, scratch_operands = 0 : i64, tpu.core_type = #tpu.core_type<tc>, window_params = [{transform_indices = @transform_0, window_bounds = array<i64: 8, 16>}, {transform_indices = @transform_1, window_bounds = array<i64: 8, 8>}, {pipeline_mode = #tpu.pipeline_mode<synchronous>, transform_indices = @transform_2, window_bounds = array<i64: 16, 128>}, {pipeline_mode = #tpu.pipeline_mode<synchronous>, transform_indices = @transform_3, window_bounds = array<i64: 8, 128>}, {pipeline_mode = #tpu.pipeline_mode<synchronous>, transform_indices = @transform_4, window_bounds = array<i64: 1, 128>}, {pipeline_mode = #tpu.pipeline_mode<synchronous>, transform_indices = @transform_5, window_bounds = array<i64: 1, 128>}, {transform_indices = @transform_6, window_bounds = array<i64: 1, 1>}, {transform_indices = @transform_7, window_bounds = array<i64: 8, 1>}]} {
    %c0 = arith.constant 0 : index
    %c0_0 = arith.constant 0 : index
    %0 = vector.load %arg3[%c0, %c0_0] : memref<16x128xf32, #tpu.memory_space<vmem>>, vector<16x128xf32>
    %c0_1 = arith.constant 0 : index
    %c0_2 = arith.constant 0 : index
    %1 = vector.load %arg4[%c0_1, %c0_2] : memref<8x128xf32, #tpu.memory_space<vmem>>, vector<8x128xf32>
    %c0_3 = arith.constant 0 : index
    %c0_4 = arith.constant 0 : index
    %2 = vector.load %arg5[%c0_3, %c0_4] : memref<1x128xf32, #tpu.memory_space<vmem>>, vector<1x128xf32>
    %c0_5 = arith.constant 0 : index
    %c0_6 = arith.constant 0 : index
    %3 = vector.load %arg6[%c0_5, %c0_6] : memref<1x128xf32, #tpu.memory_space<vmem>>, vector<1x128xf32>
    %c0_7 = arith.constant 0 : index
    %c0_8 = arith.constant 0 : index
    %4 = memref.load %arg7[%c0_7, %c0_8] : memref<1x1xf32, #tpu.memory_space<smem>>
    %c0_i32 = arith.constant 0 : i32
    %c8_i32 = arith.constant 8 : i32
    %5 = arith.muli %c0_i32, %c8_i32 : i32
    %6 = tpu.assume_multiple %5, 8 : i32
    %7 = arith.index_cast %6 : i32 to index
    %c0_9 = arith.constant 0 : index
    %8 = vector.load %arg1[%7, %c0_9] : memref<8x16xf32, #tpu.memory_space<vmem>>, vector<8x16xf32>
    %9 = arith.index_cast %6 : i32 to index
    %c0_10 = arith.constant 0 : index
    %10 = vector.load %arg2[%9, %c0_10] : memref<8x8xf32, #tpu.memory_space<vmem>>, vector<8x8xf32>
    %cst = arith.constant dense<0.000000e+00> : vector<8x128xf32>
    %11 = tpu.matmul %8, %0, %cst {dimension_numbers = #tpu.dot_dimension_numbers<[1], [0], [0], [1], [0, 0, 1, 1], [], []>} : vector<8x16xf32>, vector<16x128xf32>, vector<8x128xf32> -> vector<8x128xf32>
    %cst_11 = arith.constant dense<0.000000e+00> : vector<8x128xf32>
    %12 = tpu.matmul %10, %1, %cst_11 {dimension_numbers = #tpu.dot_dimension_numbers<[1], [0], [0], [1], [0, 0, 1, 1], [], []>} : vector<8x8xf32>, vector<8x128xf32>, vector<8x128xf32> -> vector<8x128xf32>
    %13 = arith.addf %11, %12 : vector<8x128xf32>
    %14 = vector.broadcast %2 : vector<1x128xf32> to vector<8x128xf32>
    %15 = arith.addf %13, %14 : vector<8x128xf32>
    %cst_12 = arith.constant 0.000000e+00 : f32
    %16 = vector.broadcast %cst_12 : f32 to vector<8x128xf32>
    %17 = arith.maximumf %15, %16 : vector<8x128xf32>
    %18 = vector.broadcast %3 : vector<1x128xf32> to vector<8x128xf32>
    %19 = arith.mulf %17, %18 : vector<8x128xf32>
    %cst_13 = arith.constant dense<0.000000e+00> : vector<8xf32>
    %20 = vector.multi_reduction <add>, %19, %cst_13 [1] : vector<8x128xf32> to vector<8xf32>
    %21 = vector.shape_cast %20 : vector<8xf32> to vector<8x1xf32>
    %22 = vector.broadcast %4 : f32 to vector<8x1xf32>
    %23 = arith.addf %21, %22 : vector<8x1xf32>
    %24 = arith.index_cast %6 : i32 to index
    %c0_14 = arith.constant 0 : index
    %25 = vector.load %arg8[%24, %c0_14] : memref<8x1xf32, #tpu.memory_space<vmem>>, vector<8x1xf32>
    tpu.vector_store %arg8[%24, %c0_14], %23 {strides = array<i32>} : memref<8x1xf32, #tpu.memory_space<vmem>>, vector<8x1xf32>,
    %c1_i32 = arith.constant 1 : i32
    return
  }
  func.func @transform_0(%arg0: i32) -> (i32, i32) {
    %c0_i32 = arith.constant 0 : i32
    %c0_i32_0 = arith.constant 0 : i32
    return %arg0, %c0_i32 : i32, i32
  }
  func.func @transform_1(%arg0: i32) -> (i32, i32) {
    %c0_i32 = arith.constant 0 : i32
    %c0_i32_0 = arith.constant 0 : i32
    return %arg0, %c0_i32 : i32, i32
  }
  func.func @transform_2(%arg0: i32) -> (i32, i32) {
    %c0_i32 = arith.constant 0 : i32
    %c0_i32_0 = arith.constant 0 : i32
    %c0_i32_1 = arith.constant 0 : i32
    return %c0_i32, %c0_i32_0 : i32, i32
  }
  func.func @transform_3(%arg0: i32) -> (i32, i32) {
    %c0_i32 = arith.constant 0 : i32
    %c0_i32_0 = arith.constant 0 : i32
    %c0_i32_1 = arith.constant 0 : i32
    return %c0_i32, %c0_i32_0 : i32, i32
  }
  func.func @transform_4(%arg0: i32) -> (i32, i32) {
    %c0_i32 = arith.constant 0 : i32
    %c0_i32_0 = arith.constant 0 : i32
    %c0_i32_1 = arith.constant 0 : i32
    return %c0_i32, %c0_i32_0 : i32, i32
  }
  func.func @transform_5(%arg0: i32) -> (i32, i32) {
    %c0_i32 = arith.constant 0 : i32
    %c0_i32_0 = arith.constant 0 : i32
    %c0_i32_1 = arith.constant 0 : i32
    return %c0_i32, %c0_i32_0 : i32, i32
  }
  func.func @transform_6(%arg0: i32) -> (i32, i32) {
    %c0_i32 = arith.constant 0 : i32
    %c0_i32_0 = arith.constant 0 : i32
    %c0_i32_1 = arith.constant 0 : i32
    return %c0_i32, %c0_i32_0 : i32, i32
  }
  func.func @transform_7(%arg0: i32) -> (i32, i32) {
    %c0_i32 = arith.constant 0 : i32
    %c0_i32_0 = arith.constant 0 : i32
    return %arg0, %c0_i32 : i32, i32
  }
}

</mosaic_0001>

<llo_original>
// kernel: tpu_custom_call.1
$region0: #{tpu_custom_call.1}
  #allocation0 [shape = 'u32[]', space=smem, size = 0x4, offset = 0x4, fixed_abs, tag = 'smem constant byte address 0x4 - core index']
  #allocation1 [shape = 'u32[72,128]{1,0:T(1,128)}', space=vmem, size = 0x9000, scoped, tag = 'internal scratch']
  #allocation2 [shape = 'f32[1,1]{1,0:T(1,128)S(6)}', space=smem, size = 0x200, scoped, tag = 'scoped memory for tpu_custom_call.1']
  %s0 = inlined_call_operand.hbm [shape: f32[8,16], index: 0, kind: input, shape index: {}]
  %s1 = inlined_call_operand.hbm [shape: f32[8,8], index: 1, kind: input, shape index: {}]
  %s2 = inlined_call_operand.hbm [shape: f32[16,128], index: 2, kind: input, shape index: {}]
  %s3 = inlined_call_operand.hbm [shape: f32[8,128], index: 3, kind: input, shape index: {}]
  %s4 = inlined_call_operand.vmem [shape: f32[1,128], index: 4, kind: input, shape index: {}]
  %s5 = inlined_call_operand.vmem [shape: f32[1,128], index: 5, kind: input, shape index: {}]
  %s6 = inlined_call_operand.<no memory space> [shape: f32[1,1], index: 6, kind: input, shape index: {}]
  %s7 = inlined_call_operand.vmem [shape: f32[8,1], index: 7, kind: output, shape index: {}]
  %s8 = sld [smem:[#allocation0]]
  $region54: #{tpu_custom_call.1} parent=0
    _
  %s10 = ssub.s32 1, %s8
  %s11 = scalar_select 0, %s10, %s8
  %12 = sst [smem:[#allocation2]] %s6
  $region1: #{tpu_custom_call.1} parent=0
    #allocation3 [shape = 'u8[4096]{0}', space=vmem, size = 0x1000, scoped, tag = 'input window, operand 0, single buffered']
    #allocation4 [shape = 's32[1]{0}', space=sflag, size = 0x4, scoped, tag = 'scoped memory for tpu_custom_call.1']
    #allocation5 [shape = 'u8[4096]{0}', space=vmem, size = 0x1000, scoped, tag = 'input window, operand 1, single buffered']
    #allocation6 [shape = 's32[1]{0}', space=sflag, size = 0x4, scoped, tag = 'scoped memory for tpu_custom_call.1']
    #allocation7 [shape = 'u8[8192]{0}', space=vmem, size = 0x2000, scoped, tag = 'input window, operand 2, single buffered']
    #allocation8 [shape = 'u8[4096]{0}', space=vmem, size = 0x1000, scoped, tag = 'input window, operand 3, single buffered']
    #allocation9 [shape = 's32[1]{0}', space=sflag, size = 0x4, scoped, tag = 'scoped memory for tpu_custom_call.1']
    %13 = vsyncpa [#allocation4], 0
    %14 = vsyncpa [#allocation6], 0
    %15 = vsyncpa [#allocation9], 0
    // Predicated region
    $region2: #{tpu_custom_call.1} parent=1 // pred_check
      _
    $region3: #{tpu_custom_call.1} parent=1 // pred_check_branch
      %17 = sbr.rel (0) target = $region5
    $region4: #{tpu_custom_call.1} parent=1 // pred_region
      %19 = vsyncadd [#allocation4], 0
      %s21 = sshll.u32 %s0, 4
      %s22 = int_to_ptr.hbm [resolvable:$true] %s21
      %s23 = sshll.u32 [#allocation3], 4
      %s24 = int_to_ptr.vmem [resolvable:$true] %s23
      %26 = dma.hbm_to_vmem [thread:$0]  %s22, 128, %s24, [#allocation4]
    $region5: #{tpu_custom_call.1} parent=1 // pred_fallthru
      _
    // Predicated region
    $region6: #{tpu_custom_call.1} parent=1 // pred_check
      _
    $region7: #{tpu_custom_call.1} parent=1 // pred_check_branch
      %28 = sbr.rel (0) target = $region9
    $region8: #{tpu_custom_call.1} parent=1 // pred_region
      %30 = vsyncadd [#allocation6], 0
      %s32 = sshll.u32 %s1, 4
      %s33 = int_to_ptr.hbm [resolvable:$true] %s32
      %s34 = sshll.u32 [#allocation5], 4
      %s35 = int_to_ptr.vmem [resolvable:$true] %s34
      %37 = dma.hbm_to_vmem [thread:$0]  %s33, 128, %s35, [#allocation6]
    $region9: #{tpu_custom_call.1} parent=1 // pred_fallthru
      _
    // Predicated region
    $region10: #{tpu_custom_call.1} parent=1 // pred_check
      _
    $region11: #{tpu_custom_call.1} parent=1 // pred_check_branch
      %39 = sbr.rel (0) target = $region13
    $region12: #{tpu_custom_call.1} parent=1 // pred_region
      %41 = vsyncadd [#allocation6], 0
      %s42 = sshll.u32 %s2, 4
      %s43 = int_to_ptr.hbm [resolvable:$true] %s42
      %s44 = sshll.u32 [#allocation7], 4
      %s45 = int_to_ptr.vmem [resolvable:$true] %s44
      %50 = dma.hbm_to_vmem [thread:$0]  %s43, 256, %s45, [#allocation6], 128, 128, 8
    $region13: #{tpu_custom_call.1} parent=1 // pred_fallthru
      _
    // Predicated region
    $region14: #{tpu_custom_call.1} parent=1 // pred_check
      _
    $region15: #{tpu_custom_call.1} parent=1 // pred_check_branch
      %52 = sbr.rel (0) target = $region17
    $region16: #{tpu_custom_call.1} parent=1 // pred_region
      %54 = vsyncadd [#allocation9], 0
      %s56 = sshll.u32 %s3, 4
      %s57 = int_to_ptr.hbm [resolvable:$true] %s56
      %s58 = sshll.u32 [#allocation8], 4
      %s59 = int_to_ptr.vmem [resolvable:$true] %s58
      %61 = dma.hbm_to_vmem [thread:$0]  %s57, 128, %s59, [#allocation9]
    $region17: #{tpu_custom_call.1} parent=1 // pred_fallthru
      _
    // Predicated region
    $region18: #{tpu_custom_call.1} parent=1 // pred_check
      _
    $region19: #{tpu_custom_call.1} parent=1 // pred_check_branch
      %63 = sbr.rel (0) target = $region21
    $region20: #{tpu_custom_call.1} parent=1 // pred_region
      _
    $region21: #{tpu_custom_call.1} parent=1 // pred_fallthru
      _
    // Predicated region
    $region22: #{tpu_custom_call.1} parent=1 // pred_check
      _
    $region23: #{tpu_custom_call.1} parent=1 // pred_check_branch
      %65 = sbr.rel (0) target = $region25
    $region24: #{tpu_custom_call.1} parent=1 // pred_region
      _
    $region25: #{tpu_custom_call.1} parent=1 // pred_fallthru
      _
    // Predicated region
    $region26: #{tpu_custom_call.1} parent=1 // pred_check
      _
    $region27: #{tpu_custom_call.1} parent=1 // pred_check_branch
      %67 = sbr.rel (0) target = $region29
    $region28: #{tpu_custom_call.1} parent=1 // pred_region
      _
    $region29: #{tpu_custom_call.1} parent=1 // pred_fallthru
      _
    // Predicated region
    $region30: #{tpu_custom_call.1} parent=1 // pred_check
      _
    $region31: #{tpu_custom_call.1} parent=1 // pred_check_branch
      %69 = sbr.rel (0) target = $region33
    $region32: #{tpu_custom_call.1} parent=1 // pred_region
      %71 = dma.done [#allocation4], 128
    $region33: #{tpu_custom_call.1} parent=1 // pred_fallthru
      _
    // Predicated region
    $region34: #{tpu_custom_call.1} parent=1 // pred_check
      _
    $region35: #{tpu_custom_call.1} parent=1 // pred_check_branch
      %73 = sbr.rel (0) target = $region37
    $region36: #{tpu_custom_call.1} parent=1 // pred_region
      %75 = dma.done [#allocation6], 128
    $region37: #{tpu_custom_call.1} parent=1 // pred_fallthru
      _
    // Predicated region
    $region38: #{tpu_custom_call.1} parent=1 // pred_check
      _
    $region39: #{tpu_custom_call.1} parent=1 // pred_check_branch
      %77 = sbr.rel (0) target = $region41
    $region40: #{tpu_custom_call.1} parent=1 // pred_region
      %79 = dma.done [#allocation6], 256
    $region41: #{tpu_custom_call.1} parent=1 // pred_fallthru
      _
    // Predicated region
    $region42: #{tpu_custom_call.1} parent=1 // pred_check
      _
    $region43: #{tpu_custom_call.1} parent=1 // pred_check_branch
      %81 = sbr.rel (0) target = $region45
    $region44: #{tpu_custom_call.1} parent=1 // pred_region
      %83 = dma.done [#allocation9], 128
    $region45: #{tpu_custom_call.1} parent=1 // pred_fallthru
      _
    %v84 = vld [vmem:[#allocation7] sm:$0xff]
    %v85 = vld [vmem:[#allocation7 + $0x8] sm:$0xff]
    %v86 = vld [vmem:[#allocation8] sm:$0xff]
    %v87 = vld [vmem:[%s4] sm:$0x1]
    %v88 = vld [vmem:[%s5] sm:$0x1]
    %s89 = sld [smem:[#allocation2]]
    %v90 = vld [vmem:[#allocation3] sm:$0xff]
    %v91 = vld [vmem:[#allocation5] sm:$0xff]
    %vm92 = vcmask 64512
    %v94 = vsel %vm92, %v91, 0
    %96 = vmatpush.msra.mxu0 0.0
    %97 = vmatpush.msra.mxu0 0.0
    %98 = vmatpush.msra.mxu0 0.0
    %99 = vmatpush.msra.mxu0 0.0
    %100 = vmatpush.msra.mxu0 0.0
    %101 = vmatpush.msra.mxu0 0.0
    %102 = vmatpush.msra.mxu0 0.0
    %103 = vmatpush.msra.mxu0 0.0
    %104 = vmatpush.msra.mxu0 0.0
    %105 = vmatpush.msra.mxu0 0.0
    %106 = vmatpush.msra.mxu0 0.0
    %107 = vmatpush.msra.mxu0 0.0
    %108 = vmatpush.msra.mxu0 0.0
    %109 = vmatpush.msra.mxu0 0.0
    %110 = vmatpush.msra.mxu0 0.0
    %111 = vmatpush.msra.mxu0 %v86
    %112 = vmatmul.f32.gmra.mxu0 %v94
    %v113 = vpop.f32.mrf.mxu0
    %v114 = vadd.f32 0.0, %v113
    %115 = vdwg.mxu0
    %vm116 = vcmask 130048
    %v118 = vsel %vm116, %v90, 0
    %120 = vmatpush.msra.mxu0 0.0
    %121 = vmatpush.msra.mxu0 0.0
    %122 = vmatpush.msra.mxu0 0.0
    %123 = vmatpush.msra.mxu0 0.0
    %124 = vmatpush.msra.mxu0 0.0
    %125 = vmatpush.msra.mxu0 0.0
    %126 = vmatpush.msra.mxu0 0.0
    %127 = vmatpush.msra.mxu0 0.0
    %128 = vmatpush.msra.mxu0 0.0
    %129 = vmatpush.msra.mxu0 0.0
    %130 = vmatpush.msra.mxu0 0.0
    %131 = vmatpush.msra.mxu0 0.0
    %132 = vmatpush.msra.mxu0 0.0
    %133 = vmatpush.msra.mxu0 0.0
    %134 = vmatpush.msra.mxu0 %v85
    %135 = vmatpush.msra.mxu0 %v84
    %136 = vmatmul.f32.gmra.mxu0 %v118
    %v137 = vpop.f32.mrf.mxu0
    %v138 = vadd.f32 %v114, %v137
    %139 = vdwg.mxu0
    %v141 = vperm.slane %v87, 0
    %v143 = vadd.f32 %v138, %v141
    %v144 = vmax.f32 %v143, 0.0
    %v146 = vperm.slane %v88, 0
    %v148 = vmul.f32 %v144, %v146
    %149 = vadd.xlane.f32.xlu0 %v148
    %v150 = vpop.xlane.xlu0 %149
    %v151 = vstv %s89
    %v152 = vadd.f32 %v150, %v151
    %vm153 = vcmask 7168
    %154 = vst.msk [vmem:[%s7] sm:$0xff] %vm153, %v152
    // Predicated region
    $region46: #{tpu_custom_call.1} parent=1 // pred_check
      _
    $region47: #{tpu_custom_call.1} parent=1 // pred_check_branch
      %156 = sbr.rel (0) target = $region49
    $region48: #{tpu_custom_call.1} parent=1 // pred_region
      _
    $region49: #{tpu_custom_call.1} parent=1 // pred_fallthru
      _
    // Predicated region
    $region50: #{tpu_custom_call.1} parent=1 // pred_check
      _
    $region51: #{tpu_custom_call.1} parent=1 // pred_check_branch
      %158 = sbr.rel (0) target = $region53
    $region52: #{tpu_custom_call.1} parent=1 // pred_region
      _
    $region53: #{tpu_custom_call.1} parent=1 // pred_fallthru
      _
    %159 = vsyncpa [#allocation4], 1
    %160 = vsyncpa [#allocation6], 1
    %161 = vsyncpa [#allocation9], 1

</llo_original>
